<compile_context>
chip_gen: v7x
topology: tpu7x:2x2x1
jax: 0.10.0
libtpu: 0.0.40
codegen_flags: <defaults>
</compile_context>

<pallas_src>
import functools

import jax
import jax.numpy as jnp
from jax.experimental import pallas as pl
from jax.experimental.pallas import tpu as pltpu


def _round_up(a, b):
    return (a + b - 1) // b * b


def _gap_full_kernel(x_ref, o_ref, *, inv_count):
    # Whole spatial axis in one block: single fused (upcast + reduce) + scale.
    s = jnp.sum(x_ref[...], axis=1, keepdims=True, dtype=jnp.float32)
    o_ref[...] = (s * inv_count).astype(o_ref.dtype)


def _gap_split_kernel(x_ref, o_ref, acc_ref, *, inv_count, cols, tile_cols):
    j = pl.program_id(1)

    @pl.when(j == 0)
    def _():
        acc_ref[...] = jnp.zeros_like(acc_ref)

    x = x_ref[...]
    if cols % tile_cols != 0:
        # Ragged last column tile: contents past `cols` are undefined, so
        # mask them out (the predicate is trivially true for earlier tiles).
        col = jax.lax.broadcasted_iota(jnp.int32, x.shape, 1) + j * tile_cols
        x = jnp.where(col < cols, x, jnp.zeros_like(x))

    acc_ref[...] += jnp.sum(x, axis=1, keepdims=True, dtype=jnp.float32)

    @pl.when(j == pl.num_programs(1) - 1)
    def _():
        o_ref[...] = (acc_ref[...] * inv_count).astype(o_ref.dtype)


def _pick_tile_rows(rows, sub, max_rows):
    """Largest sublane-aligned row tile <= max_rows; keep >= 2 row programs
    when there is enough row work (so v7x can shard across both cores)."""
    tr = max(sub, (max_rows // sub) * sub)
    if rows > sub:
        tr = min(tr, _round_up(pl.cdiv(rows, 2), sub))
    tr = min(tr, _round_up(rows, sub))
    if tr >= rows:
        tr = rows  # full dim: always a legal block shape
    return tr


def global_avg_pool3d(x, *, per_buffer_bytes=None):
    """x: (N, C, D, H, W) -> (N, C, 1, 1, 1), mean over (D, H, W)."""
    N, C, D, H, W = x.shape
    rows = N * C
    cols = D * H * W
    x2d = x.reshape(rows, cols)  # free view, no copy

    itemsize = x.dtype.itemsize
    sub = {4: 8, 2: 16, 1: 32}.get(itemsize, 8)  # sublane packing per dtype

    # Generation-aware VMEM budget: ~16 MiB/buffer on v5e/v6e (128 MiB VMEM),
    # ~8 MiB/buffer on v7x (64 MiB VMEM).
    try:
        vmem_cap = int(pltpu.get_tpu_info().vmem_capacity_bytes)
    except Exception:
        vmem_cap = 64 * 1024 * 1024  # conservative fallback
    if per_buffer_bytes is None:
        per_buffer_bytes = max(2 * 1024 * 1024,
                               min(16 * 1024 * 1024, vmem_cap // 8))
    vmem_limit = min(int(0.85 * vmem_cap),
                     max(32 * 1024 * 1024, 6 * per_buffer_bytes))

    inv_count = 1.0 / float(cols)
    out_shape = jax.ShapeDtypeStruct((rows, 1), x.dtype)

    if min(rows, sub) * cols * itemsize <= per_buffer_bytes:
        # ---- common path: full spatial axis in one block, 1-D row grid ----
        max_rows = max(1, per_buffer_bytes // (cols * itemsize))
        tile_rows = _pick_tile_rows(rows, sub, max_rows)
        grid = (pl.cdiv(rows, tile_rows),)

        out2d = pl.pallas_call(
            functools.partial(_gap_full_kernel, inv_count=inv_count),
            out_shape=out_shape,
            grid_spec=pltpu.PrefetchScalarGridSpec(
                num_scalar_prefetch=0,
                grid=grid,
                in_specs=[pl.BlockSpec((tile_rows, cols), lambda i: (i, 0))],
                out_specs=pl.BlockSpec((tile_rows, 1), lambda i: (i, 0)),
            ),
            compiler_params=pltpu.CompilerParams(
                dimension_semantics=("parallel",),
                vmem_limit_bytes=vmem_limit,
            ),
        )(x2d)
    else:
        # ---- fallback: spatial axis too large, split it (j reduction) ----
        tile_rows = _pick_tile_rows(rows, sub, max_rows=8 * sub)
        tile_cols = max(
            128, (per_buffer_bytes // (tile_rows * itemsize)) // 128 * 128)
        if tile_cols >= cols:
            tile_cols = cols
        grid = (pl.cdiv(rows, tile_rows), pl.cdiv(cols, tile_cols))

        out2d = pl.pallas_call(
            functools.partial(_gap_split_kernel, inv_count=inv_count,
                              cols=cols, tile_cols=tile_cols),
            out_shape=out_shape,
            grid_spec=pltpu.PrefetchScalarGridSpec(
                num_scalar_prefetch=0,
                grid=grid,
                in_specs=[pl.BlockSpec((tile_rows, tile_cols),
                                       lambda i, j: (i, j))],
                out_specs=pl.BlockSpec((tile_rows, 1), lambda i, j: (i, 0)),
                scratch_shapes=[pltpu.VMEM((tile_rows, 1), jnp.float32)],
            ),
            compiler_params=pltpu.CompilerParams(
                dimension_semantics=("parallel", "arbitrary"),
                vmem_limit_bytes=vmem_limit,
            ),
        )(x2d)

    return out2d.reshape(N, C, 1, 1, 1)


if __name__ == "__main__":
    key = jax.random.PRNGKey(0)
    k0, k1 = jax.random.split(key)

    # Primary check: common (single-block spatial) path.
    N, C, D, H, W = 2, 4, 4, 8, 8
    x = jax.random.normal(k0, (N, C, D, H, W), dtype=jnp.float32)
    out = jax.block_until_ready(global_avg_pool3d(x))
    ref = jnp.sum(x, axis=(2, 3, 4), keepdims=True) / (D * H * W)
    assert out.shape == (N, C, 1, 1, 1)
    assert jnp.allclose(out, ref, atol=1e-5, rtol=1e-5)

    # Secondary check: force the split-reduction path with a ragged
    # (non-multiple-of-128) spatial axis to exercise in-kernel masking.
    D2, H2, W2 = 4, 8, 9
    x2 = jax.random.normal(k1, (N, C, D2, H2, W2), dtype=jnp.float32)
    out2 = jax.block_until_ready(global_avg_pool3d(x2, per_buffer_bytes=4096))
    ref2 = jnp.sum(x2, axis=(2, 3, 4), keepdims=True) / (D2 * H2 * W2)
    assert out2.shape == (N, C, 1, 1, 1)
    assert jnp.allclose(out2, ref2, atol=1e-5, rtol=1e-5)

    print("KERNEL_OK")
</pallas_src>

<mosaic_0001>
module attributes {stable_mosaic.version = 11 : i64} {
  func.func @_gap_full_kernel(%arg0: i32, %arg1: memref<8x256xf32, #tpu.memory_space<vmem>>, %arg2: memref<8x1xf32, #tpu.memory_space<vmem>>) attributes {dimension_semantics = [#tpu.dimension_semantics<parallel>], iteration_bounds = array<i64: 1>, scalar_prefetch = 0 : i64, scratch_operands = 0 : i64, tpu.core_type = #tpu.core_type<tc>, window_params = [{transform_indices = @transform_0, window_bounds = array<i64: 8, 256>}, {transform_indices = @transform_1, window_bounds = array<i64: 8, 1>}]} {
    %c0 = arith.constant 0 : index
    %c0_0 = arith.constant 0 : index
    %0 = vector.load %arg1[%c0, %c0_0] : memref<8x256xf32, #tpu.memory_space<vmem>>, vector<8x256xf32>
    %cst = arith.constant dense<0.000000e+00> : vector<8xf32>
    %1 = vector.multi_reduction <add>, %0, %cst [1] : vector<8x256xf32> to vector<8xf32>
    %2 = vector.shape_cast %1 : vector<8xf32> to vector<8x1xf32>
    %cst_1 = arith.constant 3.906250e-03 : f32
    %3 = vector.broadcast %cst_1 : f32 to vector<8x1xf32>
    %4 = arith.mulf %2, %3 : vector<8x1xf32>
    %c0_2 = arith.constant 0 : index
    %c0_3 = arith.constant 0 : index
    %5 = vector.load %arg2[%c0_2, %c0_3] : memref<8x1xf32, #tpu.memory_space<vmem>>, vector<8x1xf32>
    tpu.vector_store %arg2[%c0_2, %c0_3], %4 {strides = array<i32>} : memref<8x1xf32, #tpu.memory_space<vmem>>, vector<8x1xf32>,
    return
  }
  func.func @transform_0(%arg0: i32) -> (i32, i32) {
    %c0_i32 = arith.constant 0 : i32
    %c0_i32_0 = arith.constant 0 : i32
    return %arg0, %c0_i32 : i32, i32
  }
  func.func @transform_1(%arg0: i32) -> (i32, i32) {
    %c0_i32 = arith.constant 0 : i32
    %c0_i32_0 = arith.constant 0 : i32
    return %arg0, %c0_i32 : i32, i32
  }
}

</mosaic_0001>

<llo_original>
// kernel: tpu_custom_call.1
$region0: #{tpu_custom_call.1}
  #allocation0 [shape = 'u32[]', space=smem, size = 0x4, offset = 0x4, fixed_abs, tag = 'smem constant byte address 0x4 - core index']
  #allocation1 [shape = 'u32[144,128]{1,0:T(1,128)}', space=vmem, size = 0x12000, scoped, tag = 'internal scratch']
  %s0 = inlined_call_operand.hbm [shape: f32[8,256], index: 0, kind: input, shape index: {}]
  %s1 = inlined_call_operand.vmem [shape: f32[8,1], index: 1, kind: output, shape index: {}]
  %s2 = sld [smem:[#allocation0]]
  $region18: #{tpu_custom_call.1} parent=0
    _
  %s4 = ssub.s32 1, %s2
  %s5 = scalar_select 0, %s4, %s2
  $region1: #{tpu_custom_call.1} parent=0
    #allocation2 [shape = 'u8[8192]{0}', space=vmem, size = 0x2000, scoped, tag = 'input window, operand 0, single buffered']
    #allocation3 [shape = 's32[1]{0}', space=sflag, size = 0x4, scoped, tag = 'scoped memory for tpu_custom_call.1']
    %6 = vsyncpa [#allocation3], 0
    // Predicated region
    $region2: #{tpu_custom_call.1} parent=1 // pred_check
      _
    $region3: #{tpu_custom_call.1} parent=1 // pred_check_branch
      %8 = sbr.rel (0) target = $region5
    $region4: #{tpu_custom_call.1} parent=1 // pred_region
      %s10 = ssub.s32 256, 256
      %11 = vsyncadd [#allocation3], %s10
      %s13 = sshll.u32 [#allocation2], 4
      %s14 = int_to_ptr.vmem [resolvable:$true] %s13
      %16 = dma.hbm_to_vmem [thread:$0]  %s0, 256, %s14, [#allocation3]
    $region5: #{tpu_custom_call.1} parent=1 // pred_fallthru
      _
    // Predicated region
    $region6: #{tpu_custom_call.1} parent=1 // pred_check
      _
    $region7: #{tpu_custom_call.1} parent=1 // pred_check_branch
      %18 = sbr.rel (0) target = $region9
    $region8: #{tpu_custom_call.1} parent=1 // pred_region
      %19 = dma.done [#allocation3], 256
    $region9: #{tpu_custom_call.1} parent=1 // pred_fallthru
      _
    %v20 = vld [vmem:[#allocation2] sm:$0xff]
    %v21 = vld [vmem:[#allocation2 + $0x8] sm:$0xff]
    %v22 = vadd.f32 %v20, %v21
    %23 = vadd.xlane.f32.xlu0 %v22
    %v24 = vpop.xlane.xlu0 %23
    %v25 = vmul.f32 %v24, 0.00390625
    %vm26 = vcmask 7168
    %27 = vst.msk [vmem:[%s1] sm:$0xff] %vm26, %v25
    // Predicated region
    $region10: #{tpu_custom_call.1} parent=1 // pred_check
      _
    $region11: #{tpu_custom_call.1} parent=1 // pred_check_branch
      %29 = sbr.rel (0) target = $region13
    $region12: #{tpu_custom_call.1} parent=1 // pred_region
      _
    $region13: #{tpu_custom_call.1} parent=1 // pred_fallthru
      _
    // Predicated region
    $region14: #{tpu_custom_call.1} parent=1 // pred_check
      _
    $region15: #{tpu_custom_call.1} parent=1 // pred_check_branch
      %31 = sbr.rel (0) target = $region17
    $region16: #{tpu_custom_call.1} parent=1 // pred_region
      _
    $region17: #{tpu_custom_call.1} parent=1 // pred_fallthru
      _
    %32 = vsyncpa [#allocation3], 1

</llo_original>
